<compile_context>
chip_gen: v5e
topology: v5e:2x2
jax: 0.10.0
libtpu: 0.0.40
codegen_flags: <defaults>
</compile_context>

<pallas_src>
from functools import partial

import numpy as np
import jax
import jax.numpy as jnp
from jax.experimental import pallas as pl
from jax.experimental.pallas import tpu as pltpu

BN_EPS = 1e-5      # nn.BatchNorm1d default eps
NORM_EPS = 1e-12   # F.normalize default eps


# ---------------------------------------------------------------------------
# Kernel: whole decoder for one lane-tile of the (transposed) flattened input
# ---------------------------------------------------------------------------
def decoder_kernel(x_ref, s_ref, t_ref, w_ref, b_ref, wfc_ref, bfc_ref, o_ref,
                   *, n_layers, use_residual):
    # x_ref: [C, TN] f32 -- channels on sublanes, samples on lanes (lane-dense).
    x0 = x_ref[...]
    x = x0

    # ---- MLP trunk: (folded BN-eval -> Swish -> Linear) x n_layers ----
    for l in range(n_layers):                          # static unroll, L is tiny
        xn = x * s_ref[l] + t_ref[l]                   # [C,1] broadcast over lanes
        xs = xn * jax.nn.sigmoid(xn)                   # Swish
        # W stored [out, in] (PyTorch layout): x_next^T = W @ x^T
        x = jnp.dot(w_ref[l], xs, preferred_element_type=jnp.float32) + b_ref[l]

    if use_residual:
        x = x + x0

    # ---- final head: Linear(C, 9), computed transposed -> [9, TN] ----
    y = jnp.dot(wfc_ref[...], x, preferred_element_type=jnp.float32) + bfc_ref[...]

    # ---- 6D -> 3x3 rotation (Zhou et al.) + translation, on [1, TN] rows ----
    a1x, a1y, a1z = y[0:1, :], y[1:2, :], y[2:3, :]
    a2x, a2y, a2z = y[3:4, :], y[4:5, :], y[5:6, :]
    tx,  ty,  tz  = y[6:7, :], y[7:8, :], y[8:9, :]

    # b1 = normalize(a1)
    n1 = jnp.sqrt(a1x * a1x + a1y * a1y + a1z * a1z)
    inv1 = 1.0 / jnp.maximum(n1, NORM_EPS)
    b1x, b1y, b1z = a1x * inv1, a1y * inv1, a1z * inv1

    # b2 = normalize(a2 - (b1 . a2) * b1)
    d = b1x * a2x + b1y * a2y + b1z * a2z
    u2x, u2y, u2z = a2x - d * b1x, a2y - d * b1y, a2z - d * b1z
    n2 = jnp.sqrt(u2x * u2x + u2y * u2y + u2z * u2z)
    inv2 = 1.0 / jnp.maximum(n2, NORM_EPS)
    b2x, b2y, b2z = u2x * inv2, u2y * inv2, u2z * inv2

    # b3 = cross(b1, b2)
    b3x = b1y * b2z - b1z * b2y
    b3y = b1z * b2x - b1x * b2z
    b3z = b1x * b2y - b1y * b2x

    # assemble [12, TN] (lane-dense) and do a single unmasked store
    o_ref[...] = jnp.concatenate(
        [b1x, b1y, b1z, b2x, b2y, b2z, b3x, b3y, b3z, tx, ty, tz], axis=0)


# ---------------------------------------------------------------------------
# Wrapper
# ---------------------------------------------------------------------------
def _round_up(a, m):
    return (a + m - 1) // m * m


def _choose_tile(n, target=512):
    """Lane tile: multiple of 128, 128..target; >=2 balanced steps for v7x when possible."""
    npad = _round_up(max(n, 1), 128)
    if npad <= 256:                 # tiny problem: single tile, grid=1
        return npad
    half = _round_up((n + 1) // 2, 128)
    return int(min(target, half))


def cont6d_rotation_decoder(x_in, params, *, n_layers, use_residual=True,
                            block_n=None):
    prefix = x_in.shape[:-1]
    C = x_in.shape[-1]
    x2 = x_in.reshape(-1, C).astype(jnp.float32)
    N = x2.shape[0]

    tn = block_n if block_n is not None else _choose_tile(N)
    tn = _round_up(tn, 128)
    Np = _round_up(N, tn)

    # Transposed, padded input: [C, Np]; padded columns stay finite (eps clamps).
    xT = jnp.pad(x2, ((0, Np - N), (0, 0))).T

    # Fold eval-mode BatchNorm into per-layer scale/bias: xn = x*s + t
    s = params["bn_gamma"] * jax.lax.rsqrt(params["bn_var"] + BN_EPS)   # [L, C]
    t = params["bn_beta"] - params["bn_mean"] * s                       # [L, C]
    L = s.shape[0]
    s3 = s[..., None]                       # [L, C, 1]  (2-D per-layer slices)
    t3 = t[..., None]                       # [L, C, 1]
    w3 = params["lin_w"]                    # [L, C, C]  (out, in)
    b3 = params["lin_b"][..., None]         # [L, C, 1]
    wfc = params["fc_w"]                    # [9, C]     (out, in)
    bfc = params["fc_b"][:, None]           # [9, 1]

    c2 = lambda i: (0, 0)
    c3 = lambda i: (0, 0, 0)

    # Raise the scoped VMEM limit only if the (double-buffered) footprint needs it.
    param_bytes = 4 * (2 * L * C + L * C * C + L * C + 9 * C + 9)
    tile_bytes = 4 * (C * tn + 12 * tn)
    est = 2 * (param_bytes + tile_bytes)
    cp_kwargs = dict(dimension_semantics=("parallel",))
    if est > 12 * 1024 * 1024:
        cp_kwargs["vmem_limit_bytes"] = int(min(2 * est, 64 * 1024 * 1024))

    out_t = pl.pallas_call(
        partial(decoder_kernel, n_layers=n_layers, use_residual=use_residual),
        out_shape=jax.ShapeDtypeStruct((12, Np), jnp.float32),
        grid=(Np // tn,),
        in_specs=[
            pl.BlockSpec((C, tn), lambda i: (0, i)),   # x^T lane tile
            pl.BlockSpec((L, C, 1), c3),               # folded BN scale
            pl.BlockSpec((L, C, 1), c3),               # folded BN bias
            pl.BlockSpec((L, C, C), c3),               # stacked linear W (out,in)
            pl.BlockSpec((L, C, 1), c3),               # stacked linear b
            pl.BlockSpec((9, C), c2),                  # fc W (out,in)
            pl.BlockSpec((9, 1), c2),                  # fc b
        ],
        out_specs=pl.BlockSpec((12, tn), lambda i: (0, i)),   # lane-dense output
        compiler_params=pltpu.CompilerParams(**cp_kwargs),
    )(xT, s3, t3, w3, b3, wfc, bfc)

    # layout plumbing back to [..., 12]
    return out_t[:, :N].T.reshape(prefix + (12,))


# ---------------------------------------------------------------------------
# Deterministic parameter init (PyTorch layout: weights [out, in])
# ---------------------------------------------------------------------------
def init_params(key, n_layers, n_channels):
    C = n_channels
    L = max(n_layers, 1)                 # keep non-empty arrays even if n_layers==0
    ks = jax.random.split(key, 8)
    return {
        "bn_gamma": 1.0 + 0.1 * jax.random.normal(ks[0], (L, C), jnp.float32),
        "bn_beta": 0.1 * jax.random.normal(ks[1], (L, C), jnp.float32),
        "bn_mean": 0.1 * jax.random.normal(ks[2], (L, C), jnp.float32),
        "bn_var": jax.random.uniform(ks[3], (L, C), jnp.float32, 0.5, 1.5),
        "lin_w": 0.1 * jax.random.normal(ks[4], (L, C, C), jnp.float32),   # [out, in]
        "lin_b": 0.05 * jax.random.normal(ks[5], (L, C), jnp.float32),
        "fc_w": 0.2 * jax.random.normal(ks[6], (9, C), jnp.float32),       # [out, in]
        "fc_b": 0.1 * jax.random.normal(ks[7], (9,), jnp.float32),
    }


# ---------------------------------------------------------------------------
# Pure-JAX reference (mirrors the PyTorch forward, eval-mode BN)
# ---------------------------------------------------------------------------
def ref_forward(x_in, params, *, n_layers, use_residual=True):
    prefix = x_in.shape[:-1]
    C = x_in.shape[-1]
    x0 = x_in.reshape(-1, C).astype(jnp.float32)
    x = x0
    for l in range(n_layers):
        inv = jax.lax.rsqrt(params["bn_var"][l] + BN_EPS)
        xn = (x - params["bn_mean"][l]) * inv * params["bn_gamma"][l] + params["bn_beta"][l]
        xs = xn * jax.nn.sigmoid(xn)
        x = xs @ params["lin_w"][l].T + params["lin_b"][l]
    if use_residual:
        x = x + x0
    y = x @ params["fc_w"].T + params["fc_b"]
    a1, a2, tra3 = y[:, :3], y[:, 3:6], y[:, 6:]

    def normalize(v):
        n = jnp.sqrt(jnp.sum(v * v, axis=-1, keepdims=True))
        return v / jnp.maximum(n, NORM_EPS)

    b1 = normalize(a1)
    b2 = normalize(a2 - jnp.sum(b1 * a2, axis=-1, keepdims=True) * b1)
    b3 = jnp.cross(b1, b2)
    rot = jnp.stack([b1, b2, b3], axis=-2).reshape(-1, 9)
    return jnp.concatenate([rot, tra3], axis=-1).reshape(prefix + (12,))


# ---------------------------------------------------------------------------
if __name__ == "__main__":
    B, S, C, L = 2, 8, 32, 2   # prefix (2, 8) -> 16 codes, 32 channels, 2 MLP layers

    key = jax.random.PRNGKey(0)
    kp, kx = jax.random.split(key)
    params = init_params(kp, n_layers=L, n_channels=C)
    x = jax.random.normal(kx, (B, S, C), jnp.float32)

    out = jax.block_until_ready(cont6d_rotation_decoder(x, params, n_layers=L))
    ref = jax.block_until_ready(ref_forward(x, params, n_layers=L))

    assert out.shape == (B, S, 12)
    np.testing.assert_allclose(np.asarray(out), np.asarray(ref), rtol=5e-4, atol=1e-4)

    print("KERNEL_OK")
</pallas_src>

<mosaic_0001>
module attributes {stable_mosaic.version = 11 : i64} {
  func.func @decoder_kernel(%arg0: i32, %arg1: memref<32x128xf32, #tpu.memory_space<vmem>>, %arg2: memref<2x32x1xf32, #tpu.memory_space<vmem>>, %arg3: memref<2x32x1xf32, #tpu.memory_space<vmem>>, %arg4: memref<2x32x32xf32, #tpu.memory_space<vmem>>, %arg5: memref<2x32x1xf32, #tpu.memory_space<vmem>>, %arg6: memref<9x32xf32, #tpu.memory_space<vmem>>, %arg7: memref<9x1xf32, #tpu.memory_space<vmem>>, %arg8: memref<12x128xf32, #tpu.memory_space<vmem>>) attributes {dimension_semantics = [#tpu.dimension_semantics<parallel>], iteration_bounds = array<i64: 1>, scalar_prefetch = 0 : i64, scratch_operands = 0 : i64, tpu.core_type = #tpu.core_type<tc>, window_params = [{transform_indices = @transform_0, window_bounds = array<i64: 32, 128>}, {pipeline_mode = #tpu.pipeline_mode<synchronous>, transform_indices = @transform_1, window_bounds = array<i64: 2, 32, 1>}, {pipeline_mode = #tpu.pipeline_mode<synchronous>, transform_indices = @transform_2, window_bounds = array<i64: 2, 32, 1>}, {pipeline_mode = #tpu.pipeline_mode<synchronous>, transform_indices = @transform_3, window_bounds = array<i64: 2, 32, 32>}, {pipeline_mode = #tpu.pipeline_mode<synchronous>, transform_indices = @transform_4, window_bounds = array<i64: 2, 32, 1>}, {pipeline_mode = #tpu.pipeline_mode<synchronous>, transform_indices = @transform_5, window_bounds = array<i64: 9, 32>}, {pipeline_mode = #tpu.pipeline_mode<synchronous>, transform_indices = @transform_6, window_bounds = array<i64: 9, 1>}, {transform_indices = @transform_7, window_bounds = array<i64: 12, 128>}]} {
    %c0 = arith.constant 0 : index
    %c0_0 = arith.constant 0 : index
    %0 = vector.load %arg1[%c0, %c0_0] : memref<32x128xf32, #tpu.memory_space<vmem>>, vector<32x128xf32>
    %c0_1 = arith.constant 0 : index
    %c0_2 = arith.constant 0 : index
    %c0_3 = arith.constant 0 : index
    %1 = vector.load %arg2[%c0_1, %c0_2, %c0_3] : memref<2x32x1xf32, #tpu.memory_space<vmem>>, vector<1x32x1xf32>
    %2 = vector.shape_cast %1 : vector<1x32x1xf32> to vector<32x1xf32>
    %3 = vector.broadcast %2 : vector<32x1xf32> to vector<32x128xf32>
    %4 = arith.mulf %0, %3 : vector<32x128xf32>
    %c0_4 = arith.constant 0 : index
    %c0_5 = arith.constant 0 : index
    %c0_6 = arith.constant 0 : index
    %5 = vector.load %arg3[%c0_4, %c0_5, %c0_6] : memref<2x32x1xf32, #tpu.memory_space<vmem>>, vector<1x32x1xf32>
    %6 = vector.shape_cast %5 : vector<1x32x1xf32> to vector<32x1xf32>
    %7 = vector.broadcast %6 : vector<32x1xf32> to vector<32x128xf32>
    %8 = arith.addf %4, %7 : vector<32x128xf32>
    %9 = arith.negf %8 : vector<32x128xf32>
    %10 = math.exp %9 : vector<32x128xf32>
    %cst = arith.constant 1.000000e+00 : f32
    %11 = vector.broadcast %cst : f32 to vector<32x128xf32>
    %12 = arith.addf %11, %10 : vector<32x128xf32>
    %13 = arith.divf %11, %12 : vector<32x128xf32>
    %14 = arith.mulf %8, %13 : vector<32x128xf32>
    %c0_7 = arith.constant 0 : index
    %c0_8 = arith.constant 0 : index
    %c0_9 = arith.constant 0 : index
    %15 = vector.load %arg4[%c0_7, %c0_8, %c0_9] : memref<2x32x32xf32, #tpu.memory_space<vmem>>, vector<1x32x32xf32>
    %16 = vector.shape_cast %15 : vector<1x32x32xf32> to vector<32x32xf32>
    %cst_10 = arith.constant dense<0.000000e+00> : vector<32x128xf32>
    %17 = tpu.matmul %16, %14, %cst_10 {dimension_numbers = #tpu.dot_dimension_numbers<[1], [0], [0], [1], [0, 0, 1, 1], [], []>} : vector<32x32xf32>, vector<32x128xf32>, vector<32x128xf32> -> vector<32x128xf32>
    %c0_11 = arith.constant 0 : index
    %c0_12 = arith.constant 0 : index
    %c0_13 = arith.constant 0 : index
    %18 = vector.load %arg5[%c0_11, %c0_12, %c0_13] : memref<2x32x1xf32, #tpu.memory_space<vmem>>, vector<1x32x1xf32>
    %19 = vector.shape_cast %18 : vector<1x32x1xf32> to vector<32x1xf32>
    %20 = vector.broadcast %19 : vector<32x1xf32> to vector<32x128xf32>
    %21 = arith.addf %17, %20 : vector<32x128xf32>
    %c1 = arith.constant 1 : index
    %c0_14 = arith.constant 0 : index
    %c0_15 = arith.constant 0 : index
    %22 = vector.load %arg2[%c1, %c0_14, %c0_15] : memref<2x32x1xf32, #tpu.memory_space<vmem>>, vector<1x32x1xf32>
    %23 = vector.shape_cast %22 : vector<1x32x1xf32> to vector<32x1xf32>
    %24 = vector.broadcast %23 : vector<32x1xf32> to vector<32x128xf32>
    %25 = arith.mulf %21, %24 : vector<32x128xf32>
    %c1_16 = arith.constant 1 : index
    %c0_17 = arith.constant 0 : index
    %c0_18 = arith.constant 0 : index
    %26 = vector.load %arg3[%c1_16, %c0_17, %c0_18] : memref<2x32x1xf32, #tpu.memory_space<vmem>>, vector<1x32x1xf32>
    %27 = vector.shape_cast %26 : vector<1x32x1xf32> to vector<32x1xf32>
    %28 = vector.broadcast %27 : vector<32x1xf32> to vector<32x128xf32>
    %29 = arith.addf %25, %28 : vector<32x128xf32>
    %30 = arith.negf %29 : vector<32x128xf32>
    %31 = math.exp %30 : vector<32x128xf32>
    %cst_19 = arith.constant 1.000000e+00 : f32
    %32 = vector.broadcast %cst_19 : f32 to vector<32x128xf32>
    %33 = arith.addf %32, %31 : vector<32x128xf32>
    %34 = arith.divf %32, %33 : vector<32x128xf32>
    %35 = arith.mulf %29, %34 : vector<32x128xf32>
    %c1_20 = arith.constant 1 : index
    %c0_21 = arith.constant 0 : index
    %c0_22 = arith.constant 0 : index
    %36 = vector.load %arg4[%c1_20, %c0_21, %c0_22] : memref<2x32x32xf32, #tpu.memory_space<vmem>>, vector<1x32x32xf32>
    %37 = vector.shape_cast %36 : vector<1x32x32xf32> to vector<32x32xf32>
    %cst_23 = arith.constant dense<0.000000e+00> : vector<32x128xf32>
    %38 = tpu.matmul %37, %35, %cst_23 {dimension_numbers = #tpu.dot_dimension_numbers<[1], [0], [0], [1], [0, 0, 1, 1], [], []>} : vector<32x32xf32>, vector<32x128xf32>, vector<32x128xf32> -> vector<32x128xf32>
    %c1_24 = arith.constant 1 : index
    %c0_25 = arith.constant 0 : index
    %c0_26 = arith.constant 0 : index
    %39 = vector.load %arg5[%c1_24, %c0_25, %c0_26] : memref<2x32x1xf32, #tpu.memory_space<vmem>>, vector<1x32x1xf32>
    %40 = vector.shape_cast %39 : vector<1x32x1xf32> to vector<32x1xf32>
    %41 = vector.broadcast %40 : vector<32x1xf32> to vector<32x128xf32>
    %42 = arith.addf %38, %41 : vector<32x128xf32>
    %43 = arith.addf %42, %0 : vector<32x128xf32>
    %c0_27 = arith.constant 0 : index
    %c0_28 = arith.constant 0 : index
    %44 = vector.load %arg6[%c0_27, %c0_28] : memref<9x32xf32, #tpu.memory_space<vmem>>, vector<9x32xf32>
    %cst_29 = arith.constant dense<0.000000e+00> : vector<9x128xf32>
    %45 = tpu.matmul %44, %43, %cst_29 {dimension_numbers = #tpu.dot_dimension_numbers<[1], [0], [0], [1], [0, 0, 1, 1], [], []>} : vector<9x32xf32>, vector<32x128xf32>, vector<9x128xf32> -> vector<9x128xf32>
    %c0_30 = arith.constant 0 : index
    %c0_31 = arith.constant 0 : index
    %46 = vector.load %arg7[%c0_30, %c0_31] : memref<9x1xf32, #tpu.memory_space<vmem>>, vector<9x1xf32>
    %47 = vector.broadcast %46 : vector<9x1xf32> to vector<9x128xf32>
    %48 = arith.addf %45, %47 : vector<9x128xf32>
    %49 = vector.extract_strided_slice %48 {offsets = [0, 0], sizes = [1, 128], strides = [1, 1]} : vector<9x128xf32> to vector<1x128xf32>
    %50 = vector.extract_strided_slice %48 {offsets = [1, 0], sizes = [1, 128], strides = [1, 1]} : vector<9x128xf32> to vector<1x128xf32>
    %51 = vector.extract_strided_slice %48 {offsets = [2, 0], sizes = [1, 128], strides = [1, 1]} : vector<9x128xf32> to vector<1x128xf32>
    %52 = vector.extract_strided_slice %48 {offsets = [3, 0], sizes = [1, 128], strides = [1, 1]} : vector<9x128xf32> to vector<1x128xf32>
    %53 = vector.extract_strided_slice %48 {offsets = [4, 0], sizes = [1, 128], strides = [1, 1]} : vector<9x128xf32> to vector<1x128xf32>
    %54 = vector.extract_strided_slice %48 {offsets = [5, 0], sizes = [1, 128], strides = [1, 1]} : vector<9x128xf32> to vector<1x128xf32>
    %55 = vector.extract_strided_slice %48 {offsets = [6, 0], sizes = [1, 128], strides = [1, 1]} : vector<9x128xf32> to vector<1x128xf32>
    %56 = vector.extract_strided_slice %48 {offsets = [7, 0], sizes = [1, 128], strides = [1, 1]} : vector<9x128xf32> to vector<1x128xf32>
    %57 = vector.extract_strided_slice %48 {offsets = [8, 0], sizes = [1, 128], strides = [1, 1]} : vector<9x128xf32> to vector<1x128xf32>
    %58 = arith.mulf %49, %49 : vector<1x128xf32>
    %59 = arith.mulf %50, %50 : vector<1x128xf32>
    %60 = arith.addf %58, %59 : vector<1x128xf32>
    %61 = arith.mulf %51, %51 : vector<1x128xf32>
    %62 = arith.addf %60, %61 : vector<1x128xf32>
    %63 = math.sqrt %62 : vector<1x128xf32>
    %cst_32 = arith.constant 9.99999996E-13 : f32
    %64 = vector.broadcast %cst_32 : f32 to vector<1x128xf32>
    %65 = arith.maximumf %63, %64 : vector<1x128xf32>
    %cst_33 = arith.constant 1.000000e+00 : f32
    %66 = vector.broadcast %cst_33 : f32 to vector<1x128xf32>
    %67 = arith.divf %66, %65 : vector<1x128xf32>
    %68 = arith.mulf %49, %67 : vector<1x128xf32>
    %69 = arith.mulf %50, %67 : vector<1x128xf32>
    %70 = arith.mulf %51, %67 : vector<1x128xf32>
    %71 = arith.mulf %68, %52 : vector<1x128xf32>
    %72 = arith.mulf %69, %53 : vector<1x128xf32>
    %73 = arith.addf %71, %72 : vector<1x128xf32>
    %74 = arith.mulf %70, %54 : vector<1x128xf32>
    %75 = arith.addf %73, %74 : vector<1x128xf32>
    %76 = arith.mulf %75, %68 : vector<1x128xf32>
    %77 = arith.subf %52, %76 : vector<1x128xf32>
    %78 = arith.mulf %75, %69 : vector<1x128xf32>
    %79 = arith.subf %53, %78 : vector<1x128xf32>
    %80 = arith.mulf %75, %70 : vector<1x128xf32>
    %81 = arith.subf %54, %80 : vector<1x128xf32>
    %82 = arith.mulf %77, %77 : vector<1x128xf32>
    %83 = arith.mulf %79, %79 : vector<1x128xf32>
    %84 = arith.addf %82, %83 : vector<1x128xf32>
    %85 = arith.mulf %81, %81 : vector<1x128xf32>
    %86 = arith.addf %84, %85 : vector<1x128xf32>
    %87 = math.sqrt %86 : vector<1x128xf32>
    %cst_34 = arith.constant 9.99999996E-13 : f32
    %88 = vector.broadcast %cst_34 : f32 to vector<1x128xf32>
    %89 = arith.maximumf %87, %88 : vector<1x128xf32>
    %cst_35 = arith.constant 1.000000e+00 : f32
    %90 = vector.broadcast %cst_35 : f32 to vector<1x128xf32>
    %91 = arith.divf %90, %89 : vector<1x128xf32>
    %92 = arith.mulf %77, %91 : vector<1x128xf32>
    %93 = arith.mulf %79, %91 : vector<1x128xf32>
    %94 = arith.mulf %81, %91 : vector<1x128xf32>
    %95 = arith.mulf %69, %94 : vector<1x128xf32>
    %96 = arith.mulf %70, %93 : vector<1x128xf32>
    %97 = arith.subf %95, %96 : vector<1x128xf32>
    %98 = arith.mulf %70, %92 : vector<1x128xf32>
    %99 = arith.mulf %68, %94 : vector<1x128xf32>
    %100 = arith.subf %98, %99 : vector<1x128xf32>
    %101 = arith.mulf %68, %93 : vector<1x128xf32>
    %102 = arith.mulf %69, %92 : vector<1x128xf32>
    %103 = arith.subf %101, %102 : vector<1x128xf32>
    %104 = tpu.concatenate %68, %69, %70, %92, %93, %94, %97, %100, %103, %55, %56, %57 in 0 : vector<1x128xf32>, vector<1x128xf32>, vector<1x128xf32>, vector<1x128xf32>, vector<1x128xf32>, vector<1x128xf32>, vector<1x128xf32>, vector<1x128xf32>, vector<1x128xf32>, vector<1x128xf32>, vector<1x128xf32>, vector<1x128xf32> -> vector<12x128xf32>
    %c0_36 = arith.constant 0 : index
    %c0_37 = arith.constant 0 : index
    %105 = vector.load %arg8[%c0_36, %c0_37] : memref<12x128xf32, #tpu.memory_space<vmem>>, vector<12x128xf32>
    tpu.vector_store %arg8[%c0_36, %c0_37], %104 {strides = array<i32>} : memref<12x128xf32, #tpu.memory_space<vmem>>, vector<12x128xf32>,
    return
  }
  func.func @transform_0(%arg0: i32) -> (i32, i32) {
    %c0_i32 = arith.constant 0 : i32
    %c0_i32_0 = arith.constant 0 : i32
    return %c0_i32, %arg0 : i32, i32
  }
  func.func @transform_1(%arg0: i32) -> (i32, i32, i32) {
    %c0_i32 = arith.constant 0 : i32
    %c0_i32_0 = arith.constant 0 : i32
    %c0_i32_1 = arith.constant 0 : i32
    %c0_i32_2 = arith.constant 0 : i32
    return %c0_i32, %c0_i32_0, %c0_i32_1 : i32, i32, i32
  }
  func.func @transform_2(%arg0: i32) -> (i32, i32, i32) {
    %c0_i32 = arith.constant 0 : i32
    %c0_i32_0 = arith.constant 0 : i32
    %c0_i32_1 = arith.constant 0 : i32
    %c0_i32_2 = arith.constant 0 : i32
    return %c0_i32, %c0_i32_0, %c0_i32_1 : i32, i32, i32
  }
  func.func @transform_3(%arg0: i32) -> (i32, i32, i32) {
    %c0_i32 = arith.constant 0 : i32
    %c0_i32_0 = arith.constant 0 : i32
    %c0_i32_1 = arith.constant 0 : i32
    %c0_i32_2 = arith.constant 0 : i32
    return %c0_i32, %c0_i32_0, %c0_i32_1 : i32, i32, i32
  }
  func.func @transform_4(%arg0: i32) -> (i32, i32, i32) {
    %c0_i32 = arith.constant 0 : i32
    %c0_i32_0 = arith.constant 0 : i32
    %c0_i32_1 = arith.constant 0 : i32
    %c0_i32_2 = arith.constant 0 : i32
    return %c0_i32, %c0_i32_0, %c0_i32_1 : i32, i32, i32
  }
  func.func @transform_5(%arg0: i32) -> (i32, i32) {
    %c0_i32 = arith.constant 0 : i32
    %c0_i32_0 = arith.constant 0 : i32
    %c0_i32_1 = arith.constant 0 : i32
    return %c0_i32, %c0_i32_0 : i32, i32
  }
  func.func @transform_6(%arg0: i32) -> (i32, i32) {
    %c0_i32 = arith.constant 0 : i32
    %c0_i32_0 = arith.constant 0 : i32
    %c0_i32_1 = arith.constant 0 : i32
    return %c0_i32, %c0_i32_0 : i32, i32
  }
  func.func @transform_7(%arg0: i32) -> (i32, i32) {
    %c0_i32 = arith.constant 0 : i32
    %c0_i32_0 = arith.constant 0 : i32
    return %c0_i32, %arg0 : i32, i32
  }
}

</mosaic_0001>

<llo_original>
// kernel: tpu_custom_call.1
$region0: #{tpu_custom_call.1}
  #allocation0 [shape = 'u32[]', space=smem, size = 0x4, offset = 0x4, fixed_abs, tag = 'smem constant byte address 0x4 - core index']
  #allocation1 [shape = 'u32[72,128]{1,0:T(1,128)}', space=vmem, size = 0x9000, scoped, tag = 'internal scratch']
  %s0 = inlined_call_operand.vmem [shape: f32[32,128], index: 0, kind: input, shape index: {}]
  %s1 = inlined_call_operand.vmem [shape: f32[2,32,1], index: 1, kind: input, shape index: {}]
  %s2 = inlined_call_operand.vmem [shape: f32[2,32,1], index: 2, kind: input, shape index: {}]
  %s3 = inlined_call_operand.vmem [shape: f32[2,32,32], index: 3, kind: input, shape index: {}]
  %s4 = inlined_call_operand.vmem [shape: f32[2,32,1], index: 4, kind: input, shape index: {}]
  %s5 = inlined_call_operand.vmem [shape: f32[9,32], index: 5, kind: input, shape index: {}]
  %s6 = inlined_call_operand.vmem [shape: f32[9,1], index: 6, kind: input, shape index: {}]
  %s7 = inlined_call_operand.hbm [shape: f32[12,128], index: 7, kind: output, shape index: {}]
  %s8 = sld [smem:[#allocation0]]
  $region38: #{tpu_custom_call.1} parent=0
    _
  %s10 = ssub.s32 1, %s8
  %s11 = scalar_select 0, %s10, %s8
  $region1: #{tpu_custom_call.1} parent=0
    #allocation2 [shape = 'u8[8192]{0}', space=vmem, size = 0x2000, scoped, tag = 'output window, operand 0, single buffered']
    #allocation3 [shape = 's32[1]{0}', space=sflag, size = 0x4, scoped, tag = 'scoped memory for tpu_custom_call.1']
    %12 = vsyncpa [#allocation3], 0
    // Predicated region
    $region2: #{tpu_custom_call.1} parent=1 // pred_check
      _
    $region3: #{tpu_custom_call.1} parent=1 // pred_check_branch
      %14 = sbr.rel (0) target = $region5
    $region4: #{tpu_custom_call.1} parent=1 // pred_region
      _
    $region5: #{tpu_custom_call.1} parent=1 // pred_fallthru
      _
    // Predicated region
    $region6: #{tpu_custom_call.1} parent=1 // pred_check
      _
    $region7: #{tpu_custom_call.1} parent=1 // pred_check_branch
      %16 = sbr.rel (0) target = $region9
    $region8: #{tpu_custom_call.1} parent=1 // pred_region
      _
    $region9: #{tpu_custom_call.1} parent=1 // pred_fallthru
      _
    // Predicated region
    $region10: #{tpu_custom_call.1} parent=1 // pred_check
      _
    $region11: #{tpu_custom_call.1} parent=1 // pred_check_branch
      %18 = sbr.rel (0) target = $region13
    $region12: #{tpu_custom_call.1} parent=1 // pred_region
      _
    $region13: #{tpu_custom_call.1} parent=1 // pred_fallthru
      _
    // Predicated region
    $region14: #{tpu_custom_call.1} parent=1 // pred_check
      _
    $region15: #{tpu_custom_call.1} parent=1 // pred_check_branch
      %20 = sbr.rel (0) target = $region17
    $region16: #{tpu_custom_call.1} parent=1 // pred_region
      _
    $region17: #{tpu_custom_call.1} parent=1 // pred_fallthru
      _
    // Predicated region
    $region18: #{tpu_custom_call.1} parent=1 // pred_check
      _
    $region19: #{tpu_custom_call.1} parent=1 // pred_check_branch
      %22 = sbr.rel (0) target = $region21
    $region20: #{tpu_custom_call.1} parent=1 // pred_region
      _
    $region21: #{tpu_custom_call.1} parent=1 // pred_fallthru
      _
    // Predicated region
    $region22: #{tpu_custom_call.1} parent=1 // pred_check
      _
    $region23: #{tpu_custom_call.1} parent=1 // pred_check_branch
      %24 = sbr.rel (0) target = $region25
    $region24: #{tpu_custom_call.1} parent=1 // pred_region
      _
    $region25: #{tpu_custom_call.1} parent=1 // pred_fallthru
      _
    // Predicated region
    $region26: #{tpu_custom_call.1} parent=1 // pred_check
      _
    $region27: #{tpu_custom_call.1} parent=1 // pred_check_branch
      %26 = sbr.rel (0) target = $region29
    $region28: #{tpu_custom_call.1} parent=1 // pred_region
      _
    $region29: #{tpu_custom_call.1} parent=1 // pred_fallthru
      _
    %v27 = vld [vmem:[%s0] sm:$0xff]
    %v28 = vld [vmem:[%s0 + $0x8] sm:$0xff]
    %v29 = vld [vmem:[%s0 + $0x10] sm:$0xff]
    %v30 = vld [vmem:[%s0 + $0x18] sm:$0xff]
    %v31 = vld [vmem:[%s1] sm:$0xff]
    %v32 = vld [vmem:[%s1 + $0x8] sm:$0xff]
    %v33 = vld [vmem:[%s1 + $0x10] sm:$0xff]
    %v34 = vld [vmem:[%s1 + $0x18] sm:$0xff]
    %36 = vset.pattern.permute.xlu0 0
    %37 = vperm.xlu0 %36, %v31
    %v38 = vpop.permute.xlu0 %37
    %41 = vset.pattern.permute.xlu0 0
    %42 = vperm.xlu0 %41, %v32
    %v43 = vpop.permute.xlu0 %42
    %46 = vset.pattern.permute.xlu0 0
    %47 = vperm.xlu0 %46, %v33
    %v48 = vpop.permute.xlu0 %47
    %51 = vset.pattern.permute.xlu0 0
    %52 = vperm.xlu0 %51, %v34
    %v53 = vpop.permute.xlu0 %52
    %v55 = vmul.f32 %v27, %v38
    %v56 = vmul.f32 %v28, %v43
    %v57 = vmul.f32 %v29, %v48
    %v58 = vmul.f32 %v30, %v53
    %v59 = vld [vmem:[%s2] sm:$0xff]
    %v60 = vld [vmem:[%s2 + $0x8] sm:$0xff]
    %v61 = vld [vmem:[%s2 + $0x10] sm:$0xff]
    %v62 = vld [vmem:[%s2 + $0x18] sm:$0xff]
    %64 = vset.pattern.permute.xlu0 0
    %65 = vperm.xlu0 %64, %v59
    %v66 = vpop.permute.xlu0 %65
    %69 = vset.pattern.permute.xlu0 0
    %70 = vperm.xlu0 %69, %v60
    %v71 = vpop.permute.xlu0 %70
    %74 = vset.pattern.permute.xlu0 0
    %75 = vperm.xlu0 %74, %v61
    %v76 = vpop.permute.xlu0 %75
    %79 = vset.pattern.permute.xlu0 0
    %80 = vperm.xlu0 %79, %v62
    %v81 = vpop.permute.xlu0 %80
    %v83 = vadd.f32 %v55, %v66
    %v84 = vadd.f32 %v56, %v71
    %v85 = vadd.f32 %v57, %v76
    %v86 = vadd.f32 %v58, %v81
    %v87 = vxor.u32 %v83, 2147483648
    %v88 = vxor.u32 %v84, 2147483648
    %v89 = vxor.u32 %v85, 2147483648
    %v90 = vxor.u32 %v86, 2147483648
    %v91 = vmul.f32 %v87, 1.442695
    %v92 = vpow.pop %v91
    %v93 = vmul.f32 %v88, 1.442695
    %v94 = vpow.pop %v93
    %v95 = vmul.f32 %v89, 1.442695
    %v96 = vpow.pop %v95
    %v97 = vmul.f32 %v90, 1.442695
    %v98 = vpow.pop %v97
    %v99 = vadd.f32 %v92, 1.0
    %v100 = vadd.f32 %v94, 1.0
    %v101 = vadd.f32 %v96, 1.0
    %v102 = vadd.f32 %v98, 1.0
    %v103 = vrcp.pop %v99
    %v104 = vmul.f32 %v99, %v103
    %v105 = vsub.f32 1.0, %v104
    %v106 = vmul.f32 %v103, %v105
    %v107 = vadd.f32 %v103, %v106
    %vm108 = vweird.f32 %v99
    %vm109 = vweird.f32 %v103
    %vm110 = vmor %vm108, %vm109
    %v111 = vsel %vm110, %v103, %v107
    %v112 = vand.u32 2147483647, %v99
    %vm113 = vcmp.eq.f32.partialorder %v112, 8.507059e+37
    %v114 = vand.u32 %v99, 2147483648
    %v115 = vor.u32 1.1754944e-38, %v114
    %v116 = vsel %vm113, %v115, %v111
    %v117 = vmul.f32 1.0, %v116
    %v118 = vrcp.pop %v100
    %v119 = vmul.f32 %v100, %v118
    %v120 = vsub.f32 1.0, %v119
    %v121 = vmul.f32 %v118, %v120
    %v122 = vadd.f32 %v118, %v121
    %vm123 = vweird.f32 %v100
    %vm124 = vweird.f32 %v118
    %vm125 = vmor %vm123, %vm124
    %v126 = vsel %vm125, %v118, %v122
    %v127 = vand.u32 2147483647, %v100
    %vm128 = vcmp.eq.f32.partialorder %v127, 8.507059e+37
    %v129 = vand.u32 %v100, 2147483648
    %v130 = vor.u32 1.1754944e-38, %v129
    %v131 = vsel %vm128, %v130, %v126
    %v132 = vmul.f32 1.0, %v131
    %v133 = vrcp.pop %v101
    %v134 = vmul.f32 %v101, %v133
    %v135 = vsub.f32 1.0, %v134
    %v136 = vmul.f32 %v133, %v135
    %v137 = vadd.f32 %v133, %v136
    %vm138 = vweird.f32 %v101
    %vm139 = vweird.f32 %v133
    %vm140 = vmor %vm138, %vm139
    %v141 = vsel %vm140, %v133, %v137
    %v142 = vand.u32 2147483647, %v101
    %vm143 = vcmp.eq.f32.partialorder %v142, 8.507059e+37
    %v144 = vand.u32 %v101, 2147483648
    %v145 = vor.u32 1.1754944e-38, %v144
    %v146 = vsel %vm143, %v145, %v141
    %v147 = vmul.f32 1.0, %v146
    %v148 = vrcp.pop %v102
    %v149 = vmul.f32 %v102, %v148
    %v150 = vsub.f32 1.0, %v149
    %v151 = vmul.f32 %v148, %v150
    %v152 = vadd.f32 %v148, %v151
    %vm153 = vweird.f32 %v102
    %vm154 = vweird.f32 %v148
    %vm155 = vmor %vm153, %vm154
    %v156 = vsel %vm155, %v148, %v152
    %v157 = vand.u32 2147483647, %v102
    %vm158 = vcmp.eq.f32.partialorder %v157, 8.507059e+37
    %v159 = vand.u32 %v102, 2147483648
    %v160 = vor.u32 1.1754944e-38, %v159
    %v161 = vsel %vm158, %v160, %v156
    %v162 = vmul.f32 1.0, %v161
    %v163 = vmul.f32 %v83, %v117
    %v164 = vmul.f32 %v84, %v132
    %v165 = vmul.f32 %v85, %v147
    %v166 = vmul.f32 %v86, %v162
    %v167 = vld [vmem:[%s3] sm:$0xff]
    %v168 = vld [vmem:[%s3 + $0x8] sm:$0xff]
    %v169 = vld [vmem:[%s3 + $0x10] sm:$0xff]
    %v170 = vld [vmem:[%s3 + $0x18] sm:$0xff]
    %v171 = vld [vmem:[%s4] sm:$0xff]
    %v172 = vld [vmem:[%s4 + $0x8] sm:$0xff]
    %v173 = vld [vmem:[%s4 + $0x10] sm:$0xff]
    %v174 = vld [vmem:[%s4 + $0x18] sm:$0xff]
    %176 = vset.pattern.permute.xlu0 0
    %177 = vperm.xlu0 %176, %v171
    %v178 = vpop.permute.xlu0 %177
    %181 = vset.pattern.permute.xlu0 0
    %182 = vperm.xlu0 %181, %v172
    %v183 = vpop.permute.xlu0 %182
    %186 = vset.pattern.permute.xlu0 0
    %187 = vperm.xlu0 %186, %v173
    %v188 = vpop.permute.xlu0 %187
    %191 = vset.pattern.permute.xlu0 0
    %192 = vperm.xlu0 %191, %v174
    %v193 = vpop.permute.xlu0 %192
    %vm195 = vcmask 261120
    %v197 = vsel %vm195, %v167, 0
    %v200 = vsel %vm195, %v168, 0
    %v203 = vsel %vm195, %v169, 0
    %v206 = vsel %vm195, %v170, 0
    %208 = vmatpush.msra.mxu0 0.0
    %209 = vmatpush.msra.mxu0 0.0
    %210 = vmatpush.msra.mxu0 0.0
    %211 = vmatpush.msra.mxu0 0.0
    %212 = vmatpush.msra.mxu0 0.0
    %213 = vmatpush.msra.mxu0 0.0
    %214 = vmatpush.msra.mxu0 0.0
    %215 = vmatpush.msra.mxu0 0.0
    %216 = vmatpush.msra.mxu0 0.0
    %217 = vmatpush.msra.mxu0 0.0
    %218 = vmatpush.msra.mxu0 0.0
    %219 = vmatpush.msra.mxu0 0.0
    %220 = vmatpush.msra.mxu0 %v166
    %221 = vmatpush.msra.mxu0 %v165
    %222 = vmatpush.msra.mxu0 %v164
    %223 = vmatpush.msra.mxu0 %v163
    %224 = vmatmul.f32.gmra.mxu0 %v197
    %v225 = vpop.f32.mrf.mxu0
    %v226 = vadd.f32 %v178, %v225
    %227 = vmatmul.f32.gmra.mxu0 %v200
    %v228 = vpop.f32.mrf.mxu0
    %v229 = vadd.f32 %v183, %v228
    %230 = vmatmul.f32.gmra.mxu0 %v203
    %v231 = vpop.f32.mrf.mxu0
    %v232 = vadd.f32 %v188, %v231
    %233 = vmatmul.f32.gmra.mxu0 %v206
    %v234 = vpop.f32.mrf.mxu0
    %v235 = vadd.f32 %v193, %v234
    %236 = vdwg.mxu0
    %s237 = scalar_lea.vmem %s1, 32
    %v238 = vld [vmem:[%s237] sm:$0xff]
    %v239 = vld [vmem:[%s237 + $0x8] sm:$0xff]
    %v240 = vld [vmem:[%s237 + $0x10] sm:$0xff]
    %v241 = vld [vmem:[%s237 + $0x18] sm:$0xff]
    %243 = vset.pattern.permute.xlu0 0
    %244 = vperm.xlu0 %243, %v238
    %v245 = vpop.permute.xlu0 %244
    %248 = vset.pattern.permute.xlu0 0
    %249 = vperm.xlu0 %248, %v239
    %v250 = vpop.permute.xlu0 %249
    %253 = vset.pattern.permute.xlu0 0
    %254 = vperm.xlu0 %253, %v240
    %v255 = vpop.permute.xlu0 %254
    %258 = vset.pattern.permute.xlu0 0
    %259 = vperm.xlu0 %258, %v241
    %v260 = vpop.permute.xlu0 %259
    %v262 = vmul.f32 %v226, %v245
    %v263 = vmul.f32 %v229, %v250
    %v264 = vmul.f32 %v232, %v255
    %v265 = vmul.f32 %v235, %v260
    %s266 = scalar_lea.vmem %s2, 32
    %v267 = vld [vmem:[%s266] sm:$0xff]
    %v268 = vld [vmem:[%s266 + $0x8] sm:$0xff]
    %v269 = vld [vmem:[%s266 + $0x10] sm:$0xff]
    %v270 = vld [vmem:[%s266 + $0x18] sm:$0xff]
    %272 = vset.pattern.permute.xlu0 0
    %273 = vperm.xlu0 %272, %v267
    %v274 = vpop.permute.xlu0 %273
    %277 = vset.pattern.permute.xlu0 0
    %278 = vperm.xlu0 %277, %v268
    %v279 = vpop.permute.xlu0 %278
    %282 = vset.pattern.permute.xlu0 0
    %283 = vperm.xlu0 %282, %v269
    %v284 = vpop.permute.xlu0 %283
    %287 = vset.pattern.permute.xlu0 0
    %288 = vperm.xlu0 %287, %v270
    %v289 = vpop.permute.xlu0 %288
    %v291 = vadd.f32 %v262, %v274
    %v292 = vadd.f32 %v263, %v279
    %v293 = vadd.f32 %v264, %v284
    %v294 = vadd.f32 %v265, %v289
    %v295 = vxor.u32 %v291, 2147483648
    %v296 = vxor.u32 %v292, 2147483648
    %v297 = vxor.u32 %v293, 2147483648
    %v298 = vxor.u32 %v294, 2147483648
    %v299 = vmul.f32 %v295, 1.442695
    %v300 = vpow.pop %v299
    %v301 = vmul.f32 %v296, 1.442695
    %v302 = vpow.pop %v301
    %v303 = vmul.f32 %v297, 1.442695
    %v304 = vpow.pop %v303
    %v305 = vmul.f32 %v298, 1.442695
    %v306 = vpow.pop %v305
    %v307 = vadd.f32 %v300, 1.0
    %v308 = vadd.f32 %v302, 1.0
    %v309 = vadd.f32 %v304, 1.0
    %v310 = vadd.f32 %v306, 1.0
    %v311 = vrcp.pop %v307
    %v312 = vmul.f32 %v307, %v311
    %v313 = vsub.f32 1.0, %v312
    %v314 = vmul.f32 %v311, %v313
    %v315 = vadd.f32 %v311, %v314
    %vm316 = vweird.f32 %v307
    %vm317 = vweird.f32 %v311
    %vm318 = vmor %vm316, %vm317
    %v319 = vsel %vm318, %v311, %v315
    %v320 = vand.u32 2147483647, %v307
    %vm321 = vcmp.eq.f32.partialorder %v320, 8.507059e+37
    %v322 = vand.u32 %v307, 2147483648
    %v323 = vor.u32 1.1754944e-38, %v322
    %v324 = vsel %vm321, %v323, %v319
    %v325 = vmul.f32 1.0, %v324
    %v326 = vrcp.pop %v308
    %v327 = vmul.f32 %v308, %v326
    %v328 = vsub.f32 1.0, %v327
    %v329 = vmul.f32 %v326, %v328
    %v330 = vadd.f32 %v326, %v329
    %vm331 = vweird.f32 %v308
    %vm332 = vweird.f32 %v326
    %vm333 = vmor %vm331, %vm332
    %v334 = vsel %vm333, %v326, %v330
    %v335 = vand.u32 2147483647, %v308
    %vm336 = vcmp.eq.f32.partialorder %v335, 8.507059e+37
    %v337 = vand.u32 %v308, 2147483648
    %v338 = vor.u32 1.1754944e-38, %v337
    %v339 = vsel %vm336, %v338, %v334
    %v340 = vmul.f32 1.0, %v339
    %v341 = vrcp.pop %v309
    %v342 = vmul.f32 %v309, %v341
    %v343 = vsub.f32 1.0, %v342
    %v344 = vmul.f32 %v341, %v343
    %v345 = vadd.f32 %v341, %v344
    %vm346 = vweird.f32 %v309
    %vm347 = vweird.f32 %v341
    %vm348 = vmor %vm346, %vm347
    %v349 = vsel %vm348, %v341, %v345
    %v350 = vand.u32 2147483647, %v309
    %vm351 = vcmp.eq.f32.partialorder %v350, 8.507059e+37
    %v352 = vand.u32 %v309, 2147483648
    %v353 = vor.u32 1.1754944e-38, %v352
    %v354 = vsel %vm351, %v353, %v349
    %v355 = vmul.f32 1.0, %v354
    %v356 = vrcp.pop %v310
    %v357 = vmul.f32 %v310, %v356
    %v358 = vsub.f32 1.0, %v357
    %v359 = vmul.f32 %v356, %v358
    %v360 = vadd.f32 %v356, %v359
    %vm361 = vweird.f32 %v310
    %vm362 = vweird.f32 %v356
    %vm363 = vmor %vm361, %vm362
    %v364 = vsel %vm363, %v356, %v360
    %v365 = vand.u32 2147483647, %v310
    %vm366 = vcmp.eq.f32.partialorder %v365, 8.507059e+37
    %v367 = vand.u32 %v310, 2147483648
    %v368 = vor.u32 1.1754944e-38, %v367
    %v369 = vsel %vm366, %v368, %v364
    %v370 = vmul.f32 1.0, %v369
    %v371 = vmul.f32 %v291, %v325
    %v372 = vmul.f32 %v292, %v340
    %v373 = vmul.f32 %v293, %v355
    %v374 = vmul.f32 %v294, %v370
    %s375 = scalar_lea.vmem %s3, 32
    %v376 = vld [vmem:[%s375] sm:$0xff]
    %v377 = vld [vmem:[%s375 + $0x8] sm:$0xff]
    %v378 = vld [vmem:[%s375 + $0x10] sm:$0xff]
    %v379 = vld [vmem:[%s375 + $0x18] sm:$0xff]
    %s380 = scalar_lea.vmem %s4, 32
    %v381 = vld [vmem:[%s380] sm:$0xff]
    %v382 = vld [vmem:[%s380 + $0x8] sm:$0xff]
    %v383 = vld [vmem:[%s380 + $0x10] sm:$0xff]
    %v384 = vld [vmem:[%s380 + $0x18] sm:$0xff]
    %386 = vset.pattern.permute.xlu0 0
    %387 = vperm.xlu0 %386, %v381
    %v388 = vpop.permute.xlu0 %387
    %391 = vset.pattern.permute.xlu0 0
    %392 = vperm.xlu0 %391, %v382
    %v393 = vpop.permute.xlu0 %392
    %396 = vset.pattern.permute.xlu0 0
    %397 = vperm.xlu0 %396, %v383
    %v398 = vpop.permute.xlu0 %397
    %401 = vset.pattern.permute.xlu0 0
    %402 = vperm.xlu0 %401, %v384
    %v403 = vpop.permute.xlu0 %402
    %v406 = vsel %vm195, %v376, 0
    %v409 = vsel %vm195, %v377, 0
    %v412 = vsel %vm195, %v378, 0
    %v415 = vsel %vm195, %v379, 0
    %417 = vmatpush.msra.mxu0 0.0
    %418 = vmatpush.msra.mxu0 0.0
    %419 = vmatpush.msra.mxu0 0.0
    %420 = vmatpush.msra.mxu0 0.0
    %421 = vmatpush.msra.mxu0 0.0
    %422 = vmatpush.msra.mxu0 0.0
    %423 = vmatpush.msra.mxu0 0.0
    %424 = vmatpush.msra.mxu0 0.0
    %425 = vmatpush.msra.mxu0 0.0
    %426 = vmatpush.msra.mxu0 0.0
    %427 = vmatpush.msra.mxu0 0.0
    %428 = vmatpush.msra.mxu0 0.0
    %429 = vmatpush.msra.mxu0 %v374
    %430 = vmatpush.msra.mxu0 %v373
    %431 = vmatpush.msra.mxu0 %v372
    %432 = vmatpush.msra.mxu0 %v371
    %433 = vmatmul.f32.gmra.mxu0 %v406
    %v434 = vpop.f32.mrf.mxu0
    %v435 = vadd.f32 %v388, %v434
    %436 = vmatmul.f32.gmra.mxu0 %v409
    %v437 = vpop.f32.mrf.mxu0
    %v438 = vadd.f32 %v393, %v437
    %439 = vmatmul.f32.gmra.mxu0 %v412
    %v440 = vpop.f32.mrf.mxu0
    %v441 = vadd.f32 %v398, %v440
    %442 = vmatmul.f32.gmra.mxu0 %v415
    %v443 = vpop.f32.mrf.mxu0
    %v444 = vadd.f32 %v403, %v443
    %445 = vdwg.mxu0
    %v446 = vadd.f32 %v435, %v27
    %v447 = vadd.f32 %v438, %v28
    %v448 = vadd.f32 %v441, %v29
    %v449 = vadd.f32 %v444, %v30
    %v450 = vld [vmem:[%s5] sm:$0xff]
    %v451 = vld [vmem:[%s5 + $0x8] sm:$0x1]
    %v452 = vld [vmem:[%s6] sm:$0xff]
    %v453 = vld [vmem:[%s6 + $0x8] sm:$0x1]
    %455 = vset.pattern.permute.xlu0 0
    %456 = vperm.xlu0 %455, %v452
    %v457 = vpop.permute.xlu0 %456
    %460 = vset.pattern.permute.xlu0 0
    %461 = vperm.xlu0 %460, %v453
    %v462 = vpop.permute.xlu0 %461
    %v465 = vsel %vm195, %v450, 0
    %v468 = vsel %vm195, %v451, 0
    %470 = vmatpush.msra.mxu0 0.0
    %471 = vmatpush.msra.mxu0 0.0
    %472 = vmatpush.msra.mxu0 0.0
    %473 = vmatpush.msra.mxu0 0.0
    %474 = vmatpush.msra.mxu0 0.0
    %475 = vmatpush.msra.mxu0 0.0
    %476 = vmatpush.msra.mxu0 0.0
    %477 = vmatpush.msra.mxu0 0.0
    %478 = vmatpush.msra.mxu0 0.0
    %479 = vmatpush.msra.mxu0 0.0
    %480 = vmatpush.msra.mxu0 0.0
    %481 = vmatpush.msra.mxu0 0.0
    %482 = vmatpush.msra.mxu0 %v449
    %483 = vmatpush.msra.mxu0 %v448
    %484 = vmatpush.msra.mxu0 %v447
    %485 = vmatpush.msra.mxu0 %v446
    %486 = vmatmul.f32.gmra.mxu0 %v465
    %v487 = vpop.f32.mrf.mxu0
    %v488 = vadd.f32 %v457, %v487
    %489 = vmatmul.f32.gmra.mxu0 %v468
    %v490 = vpop.f32.mrf.mxu0
    %v491 = vadd.f32 %v462, %v490
    %492 = vdwg.mxu0
    %v493 = vmul.f32 %v488, %v488
    %v495 = vrot.slane %v493, 1
    %v497 = vadd.f32 %v493, %v495
    %v498 = vrot.slane %v493, 2
    %v500 = vadd.f32 %v497, %v498
    %v501 = vrsqrt.pop %v500
    %v502 = vmul.f32 %v501, %v500
    %v503 = vmul.f32 %v502, %v501
    %v504 = vmul.f32 0.5, %v503
    %v505 = vsub.f32 1.5, %v504
    %v506 = vmul.f32 %v501, %v505
    %v507 = vmul.f32 %v500, %v506
    %vm508 = vcmp.eq.f32.partialorder %v500, inf
    %v509 = vsel %vm508, %v500, %v507
    %vm510 = vcmp.eq.f32.partialorder %v500, 0.0
    %v511 = vand.u32 %v500, 2147483648
    %v512 = vsel %vm510, %v511, %v509
    %v513 = vmax.f32 %v512, 1e-12
    %v514 = vrcp.pop %v513
    %v515 = vmul.f32 %v513, %v514
    %v516 = vsub.f32 1.0, %v515
    %v517 = vmul.f32 %v514, %v516
    %v518 = vadd.f32 %v514, %v517
    %vm519 = vweird.f32 %v513
    %vm520 = vweird.f32 %v514
    %vm521 = vmor %vm519, %vm520
    %v522 = vsel %vm521, %v514, %v518
    %v523 = vand.u32 2147483647, %v513
    %vm524 = vcmp.eq.f32.partialorder %v523, 8.507059e+37
    %v525 = vand.u32 %v513, 2147483648
    %v526 = vor.u32 1.1754944e-38, %v525
    %v527 = vsel %vm524, %v526, %v522
    %v528 = vmul.f32 1.0, %v527
    %v529 = vmul.f32 %v488, %v528
    %v531 = vrot.slane %v528, 7
    %v533 = vmul.f32 %v488, %v531
    %v534 = vrot.slane %v528, 6
    %v536 = vmul.f32 %v488, %v534
    %v538 = vrot.slane %v488, 3
    %v540 = vmul.f32 %v529, %v538
    %v541 = vmul.f32 %v533, %v538
    %v543 = vrot.slane %v541, 1
    %v545 = vadd.f32 %v540, %v543
    %v546 = vmul.f32 %v536, %v538
    %v548 = vrot.slane %v546, 2
    %v550 = vadd.f32 %v545, %v548
    %v551 = vmul.f32 %v550, %v529
    %v553 = vrot.slane %v551, 5
    %v555 = vsub.f32 %v488, %v553
    %v557 = vrot.slane %v533, 1
    %v559 = vmul.f32 %v550, %v557
    %v561 = vrot.slane %v559, 4
    %v563 = vsub.f32 %v488, %v561
    %v565 = vrot.slane %v536, 2
    %v567 = vmul.f32 %v550, %v565
    %v569 = vrot.slane %v567, 3
    %v571 = vsub.f32 %v488, %v569
    %v572 = vmul.f32 %v555, %v555
    %v573 = vmul.f32 %v563, %v563
    %v575 = vrot.slane %v573, 1
    %v577 = vadd.f32 %v572, %v575
    %v578 = vmul.f32 %v571, %v571
    %v580 = vrot.slane %v578, 2
    %v582 = vadd.f32 %v577, %v580
    %v583 = vrsqrt.pop %v582
    %v584 = vmul.f32 %v583, %v582
    %v585 = vmul.f32 %v584, %v583
    %v586 = vmul.f32 0.5, %v585
    %v587 = vsub.f32 1.5, %v586
    %v588 = vmul.f32 %v583, %v587
    %v589 = vmul.f32 %v582, %v588
    %vm590 = vcmp.eq.f32.partialorder %v582, inf
    %v591 = vsel %vm590, %v582, %v589
    %vm592 = vcmp.eq.f32.partialorder %v582, 0.0
    %v593 = vand.u32 %v582, 2147483648
    %v594 = vsel %vm592, %v593, %v591
    %v595 = vmax.f32 %v594, 1e-12
    %v596 = vrcp.pop %v595
    %v597 = vmul.f32 %v595, %v596
    %v598 = vsub.f32 1.0, %v597
    %v599 = vmul.f32 %v596, %v598
    %v600 = vadd.f32 %v596, %v599
    %vm601 = vweird.f32 %v595
    %vm602 = vweird.f32 %v596
    %vm603 = vmor %vm601, %vm602
    %v604 = vsel %vm603, %v596, %v600
    %v605 = vand.u32 2147483647, %v595
    %vm606 = vcmp.eq.f32.partialorder %v605, 8.507059e+37
    %v607 = vand.u32 %v595, 2147483648
    %v608 = vor.u32 1.1754944e-38, %v607
    %v609 = vsel %vm606, %v608, %v604
    %v610 = vmul.f32 1.0, %v609
    %v611 = vmul.f32 %v555, %v610
    %v613 = vrot.slane %v610, 7
    %v615 = vmul.f32 %v563, %v613
    %v616 = vrot.slane %v610, 6
    %v618 = vmul.f32 %v571, %v616
    %v620 = vrot.slane %v618, 4
    %v622 = vmul.f32 %v533, %v620
    %v624 = vrot.slane %v615, 2
    %v626 = vmul.f32 %v536, %v624
    %v628 = vrot.slane %v626, 1
    %v630 = vsub.f32 %v622, %v628
    %v632 = vrot.slane %v611, 1
    %v634 = vmul.f32 %v536, %v632
    %v635 = vrot.slane %v618, 5
    %v637 = vmul.f32 %v529, %v635
    %v639 = vrot.slane %v637, 6
    %v641 = vsub.f32 %v634, %v639
    %v642 = vrot.slane %v615, 4
    %v644 = vmul.f32 %v529, %v642
    %v645 = vrot.slane %v611, 2
    %v647 = vmul.f32 %v533, %v645
    %v649 = vrot.slane %v647, 1
    %v651 = vsub.f32 %v644, %v649
    %v653 = vrot.slane %v630, 3
    %v656 = vrot.slane %v641, 3
    %v658 = vrot.slane %v488, 5
    %v661 = vrot.slane %v491, 5
    %vm663 = vcmask 1040384
    %v664 = vsel %vm663, %v529, %v533
    %vm665 = vcmask 1041408
    %v666 = vsel %vm665, %v664, %v536
    %vm667 = vcmask 1042432
    %v668 = vsel %vm667, %v666, %v611
    %vm669 = vcmask 1043456
    %v670 = vsel %vm669, %v668, %v615
    %vm671 = vcmask 1044480
    %v672 = vsel %vm671, %v670, %v618
    %vm673 = vcmask 1045504
    %v674 = vsel %vm673, %v672, %v653
    %vm675 = vcmask 1046528
    %v676 = vsel %vm675, %v674, %v656
    %v677 = vsel %vm663, %v651, %v658
    %v678 = vsel %vm665, %v677, %v658
    %v679 = vsel %vm667, %v678, %v661
    %680 = vst [vmem:[#allocation2] sm:$0xff] %v676
    %681 = vst [vmem:[#allocation2 + $0x8] sm:$0xf] %v679
    // Predicated region
    $region30: #{tpu_custom_call.1} parent=1 // pred_check
      _
    $region31: #{tpu_custom_call.1} parent=1 // pred_check_branch
      %683 = sbr.rel (0) target = $region33
    $region32: #{tpu_custom_call.1} parent=1 // pred_region
      %685 = vsyncadd [#allocation3], 0
      %s686 = sshll.u32 [#allocation2], 4
      %s687 = int_to_ptr.vmem [resolvable:$true] %s686
      %s688 = sshll.u32 %s7, 4
      %s689 = int_to_ptr.hbm [resolvable:$true] %s688
      %694 = dma.vmem_to_hbm [thread:$0]  %s687, 256, %s689, [#allocation3], 128, 128, 8
    $region33: #{tpu_custom_call.1} parent=1 // pred_fallthru
      _
    // Predicated region
    $region34: #{tpu_custom_call.1} parent=1 // pred_check
      _
    $region35: #{tpu_custom_call.1} parent=1 // pred_check_branch
      %696 = sbr.rel (0) target = $region37
    $region36: #{tpu_custom_call.1} parent=1 // pred_region
      %698 = dma.done [#allocation3], 256
    $region37: #{tpu_custom_call.1} parent=1 // pred_fallthru
      _
    %699 = vsyncpa [#allocation3], 1

</llo_original>
